<compile_context>
chip_gen: v5e
topology: v5e:2x2
jax: 0.10.0
libtpu: 0.0.40
codegen_flags: <defaults>
</compile_context>

<pallas_src>
import jax
import jax.numpy as jnp
from jax.experimental import pallas as pl
from jax.experimental.pallas import tpu as pltpu


def _rope_kernel(cos_ref, sin_ref, q_ref, k_ref, qo_ref, ko_ref):
    """cos/sin: (TN, D/2) f32 tables.  q/k/out: (TBH, TN, D) tiles."""
    cos = cos_ref[...]                    # (TN, half) f32
    sin = sin_ref[...]                    # (TN, half) f32
    half = cos.shape[-1]

    def apply(x_ref, o_ref):
        x = x_ref[...].astype(jnp.float32)            # (TBH, TN, D)
        x1 = x[:, :, :half]
        x2 = x[:, :, half:]
        # out = x * cos_full + rotate_half(x) * sin_full, written half-by-half
        # (two sliced stores) so no full-tile rotated temporary is needed.
        o_ref[:, :, :half] = (x1 * cos - x2 * sin).astype(o_ref.dtype)
        o_ref[:, :, half:] = (x2 * cos + x1 * sin).astype(o_ref.dtype)

    apply(q_ref, qo_ref)
    apply(k_ref, ko_ref)


def _vmem_capacity_bytes():
    """Best-effort per-core VMEM query; conservative (v7x) fallback."""
    try:
        if jax.devices()[0].platform == "tpu":
            return int(pltpu.get_tpu_info().vmem_capacity_bytes)
    except Exception:
        pass
    return 64 * 1024 * 1024


def rotary_position_embedding(q, k, theta=10000, scale_base=8192):
    """Apply RoPE to q and k. q, k: (B, H, N, D)."""
    assert q.shape == k.shape and q.dtype == k.dtype
    B, H, N, D = q.shape
    assert D % 2 == 0
    half = D // 2

    # --- glue: half-width cos / sin tables, always built in float32 ----------
    inv_freq = 1.0 / (float(theta) ** (jnp.arange(0, D, 2, dtype=jnp.float32) / D))
    t = jnp.arange(N, dtype=jnp.float32) * (float(scale_base) / N)
    freqs = t[:, None] * inv_freq[None, :]            # (N, D/2)
    cos_h = jnp.cos(freqs)                            # (N, D/2)
    sin_h = jnp.sin(freqs)                            # (N, D/2)

    BH = B * H
    qf = q.reshape(BH, N, D)
    kf = k.reshape(BH, N, D)

    # --- generation-aware tile sizing ----------------------------------------
    itemsize = jnp.dtype(q.dtype).itemsize
    vmem_cap = _vmem_capacity_bytes()
    if vmem_cap <= 64 * 1024 * 1024:                  # v7x-class: 64 MiB / TC
        target_tile_bytes = 4 * 1024 * 1024
        vmem_limit_cap = 56 * 1024 * 1024
    else:                                             # v5e / v6e: 128 MiB
        target_tile_bytes = 8 * 1024 * 1024
        vmem_limit_cap = 100 * 1024 * 1024

    # Keep 4 double-buffered streams + ~4 tile-sized f32 temporaries under cap.
    temps_factor = 4 * 4 // itemsize                  # f32 temps per input-dtype tile
    denom = 8 + temps_factor
    target_tile_bytes = min(target_tile_bytes,
                            max(64 * 1024, (vmem_limit_cap - (4 << 20)) // denom))

    # TN: full N when small, else a multiple of 8 clamped so a single-row slab
    # (large D / f32) doesn't blow past the per-stream tile target.
    TN = min(N, 512)
    max_tn = max(8, (target_tile_bytes // max(1, D * itemsize)) // 8 * 8)
    if TN > max_tn:
        TN = max_tn
    TBH = max(1, min(BH, target_tile_bytes // max(1, TN * D * itemsize)))

    n_tiles = pl.cdiv(N, TN)
    bh_tiles = pl.cdiv(BH, TBH)

    # Megacore friendliness (v7x): ensure >= 2 blocks on some parallel axis.
    if n_tiles * bh_tiles < 2:
        if BH >= 2:
            TBH = (BH + 1) // 2
            bh_tiles = pl.cdiv(BH, TBH)
        elif N >= 16:
            TN = max(8, ((N // 2) + 7) // 8 * 8)
            n_tiles = pl.cdiv(N, TN)
    grid = (n_tiles, bh_tiles)                        # BH innermost: tables not re-DMA'd

    # --- VMEM budget (streams x double-buffer + tables + f32 temporaries) ----
    tile_bytes = TBH * TN * D * itemsize
    table_bytes = TN * half * 4
    f32_tile_bytes = TBH * TN * D * 4
    vmem_need = 4 * 2 * tile_bytes + 2 * 2 * table_bytes + 4 * f32_tile_bytes
    vmem_limit = int(min(max(vmem_need + (4 << 20), 32 * 1024 * 1024), vmem_limit_cap))

    qo, ko = pl.pallas_call(
        _rope_kernel,
        out_shape=(
            jax.ShapeDtypeStruct((BH, N, D), q.dtype),
            jax.ShapeDtypeStruct((BH, N, D), k.dtype),
        ),
        grid_spec=pltpu.PrefetchScalarGridSpec(
            num_scalar_prefetch=0,
            grid=grid,
            in_specs=[
                pl.BlockSpec((TN, half), lambda n, i: (n, 0)),        # cos half-table
                pl.BlockSpec((TN, half), lambda n, i: (n, 0)),        # sin half-table
                pl.BlockSpec((TBH, TN, D), lambda n, i: (i, n, 0)),   # q
                pl.BlockSpec((TBH, TN, D), lambda n, i: (i, n, 0)),   # k
            ],
            out_specs=[
                pl.BlockSpec((TBH, TN, D), lambda n, i: (i, n, 0)),
                pl.BlockSpec((TBH, TN, D), lambda n, i: (i, n, 0)),
            ],
        ),
        compiler_params=pltpu.CompilerParams(
            dimension_semantics=("parallel", "parallel"),
            vmem_limit_bytes=vmem_limit,
        ),
    )(cos_h, sin_h, qf, kf)

    return qo.reshape(B, H, N, D), ko.reshape(B, H, N, D)


def _reference(q, k, theta=10000, scale_base=8192):
    """Pure-JAX reference matching the PyTorch forward (f32 tables)."""
    B, H, N, D = q.shape
    inv_freq = 1.0 / (float(theta) ** (jnp.arange(0, D, 2, dtype=jnp.float32) / D))
    t = jnp.arange(N, dtype=jnp.float32) * (float(scale_base) / N)
    freqs = t[:, None] * inv_freq[None, :]
    emb = jnp.concatenate([freqs, freqs], axis=-1)
    cos = jnp.cos(emb)[None, None]
    sin = jnp.sin(emb)[None, None]

    def rotate_half(x):
        x1, x2 = jnp.split(x, 2, axis=-1)
        return jnp.concatenate([-x2, x1], axis=-1)

    def apply(x):
        xf = x.astype(jnp.float32)
        return (xf * cos + rotate_half(xf) * sin).astype(x.dtype)

    return apply(q), apply(k)


if __name__ == "__main__":
    key = jax.random.PRNGKey(0)
    kq, kk = jax.random.split(key)
    B, H, N, D = 2, 4, 16, 128
    q = jax.random.normal(kq, (B, H, N, D), dtype=jnp.float32)
    k = jax.random.normal(kk, (B, H, N, D), dtype=jnp.float32)

    q_out, k_out = rotary_position_embedding(q, k)
    jax.block_until_ready((q_out, k_out))

    q_ref, k_ref = _reference(q, k)
    assert jnp.allclose(q_out, q_ref, atol=1e-5, rtol=1e-5)
    assert jnp.allclose(k_out, k_ref, atol=1e-5, rtol=1e-5)

    print("KERNEL_OK")
</pallas_src>

<mosaic_0001>
module attributes {stable_mosaic.version = 11 : i64} {
  func.func @_rope_kernel(%arg0: i32, %arg1: i32, %arg2: memref<16x64xf32, #tpu.memory_space<vmem>>, %arg3: memref<16x64xf32, #tpu.memory_space<vmem>>, %arg4: memref<4x16x128xf32, #tpu.memory_space<vmem>>, %arg5: memref<4x16x128xf32, #tpu.memory_space<vmem>>, %arg6: memref<4x16x128xf32, #tpu.memory_space<vmem>>, %arg7: memref<4x16x128xf32, #tpu.memory_space<vmem>>) attributes {dimension_semantics = [#tpu.dimension_semantics<parallel>, #tpu.dimension_semantics<parallel>], iteration_bounds = array<i64: 1, 2>, scalar_prefetch = 0 : i64, scratch_operands = 0 : i64, tpu.core_type = #tpu.core_type<tc>, window_params = [{transform_indices = @transform_0, window_bounds = array<i64: 16, 64>}, {transform_indices = @transform_1, window_bounds = array<i64: 16, 64>}, {transform_indices = @transform_2, window_bounds = array<i64: 4, 16, 128>}, {transform_indices = @transform_3, window_bounds = array<i64: 4, 16, 128>}, {transform_indices = @transform_4, window_bounds = array<i64: 4, 16, 128>}, {transform_indices = @transform_5, window_bounds = array<i64: 4, 16, 128>}]} {
    %c0 = arith.constant 0 : index
    %c0_0 = arith.constant 0 : index
    %0 = vector.load %arg2[%c0, %c0_0] : memref<16x64xf32, #tpu.memory_space<vmem>>, vector<16x64xf32>
    %c0_1 = arith.constant 0 : index
    %c0_2 = arith.constant 0 : index
    %1 = vector.load %arg3[%c0_1, %c0_2] : memref<16x64xf32, #tpu.memory_space<vmem>>, vector<16x64xf32>
    %c0_3 = arith.constant 0 : index
    %c0_4 = arith.constant 0 : index
    %c0_5 = arith.constant 0 : index
    %2 = vector.load %arg4[%c0_3, %c0_4, %c0_5] : memref<4x16x128xf32, #tpu.memory_space<vmem>>, vector<4x16x128xf32>
    %3 = vector.extract_strided_slice %2 {offsets = [0, 0, 0], sizes = [4, 16, 64], strides = [1, 1, 1]} : vector<4x16x128xf32> to vector<4x16x64xf32>
    %4 = vector.extract_strided_slice %2 {offsets = [0, 0, 64], sizes = [4, 16, 64], strides = [1, 1, 1]} : vector<4x16x128xf32> to vector<4x16x64xf32>
    %5 = vector.shape_cast %0 : vector<16x64xf32> to vector<1x16x64xf32>
    %6 = vector.broadcast %5 : vector<1x16x64xf32> to vector<4x16x64xf32>
    %7 = arith.mulf %3, %6 : vector<4x16x64xf32>
    %8 = vector.shape_cast %1 : vector<16x64xf32> to vector<1x16x64xf32>
    %9 = vector.broadcast %8 : vector<1x16x64xf32> to vector<4x16x64xf32>
    %10 = arith.mulf %4, %9 : vector<4x16x64xf32>
    %11 = arith.subf %7, %10 : vector<4x16x64xf32>
    %c0_6 = arith.constant 0 : index
    %c0_7 = arith.constant 0 : index
    %c0_8 = arith.constant 0 : index
    %12 = vector.load %arg6[%c0_6, %c0_7, %c0_8] : memref<4x16x128xf32, #tpu.memory_space<vmem>>, vector<4x16x64xf32>
    tpu.vector_store %arg6[%c0_6, %c0_7, %c0_8], %11 {strides = array<i32>} : memref<4x16x128xf32, #tpu.memory_space<vmem>>, vector<4x16x64xf32>,
    %13 = vector.shape_cast %0 : vector<16x64xf32> to vector<1x16x64xf32>
    %14 = vector.broadcast %13 : vector<1x16x64xf32> to vector<4x16x64xf32>
    %15 = arith.mulf %4, %14 : vector<4x16x64xf32>
    %16 = vector.shape_cast %1 : vector<16x64xf32> to vector<1x16x64xf32>
    %17 = vector.broadcast %16 : vector<1x16x64xf32> to vector<4x16x64xf32>
    %18 = arith.mulf %3, %17 : vector<4x16x64xf32>
    %19 = arith.addf %15, %18 : vector<4x16x64xf32>
    %c0_9 = arith.constant 0 : index
    %c0_10 = arith.constant 0 : index
    %c64 = arith.constant 64 : index
    %20 = vector.load %arg6[%c0_9, %c0_10, %c64] : memref<4x16x128xf32, #tpu.memory_space<vmem>>, vector<4x16x64xf32>
    tpu.vector_store %arg6[%c0_9, %c0_10, %c64], %19 {strides = array<i32>} : memref<4x16x128xf32, #tpu.memory_space<vmem>>, vector<4x16x64xf32>,
    %c0_11 = arith.constant 0 : index
    %c0_12 = arith.constant 0 : index
    %c0_13 = arith.constant 0 : index
    %21 = vector.load %arg5[%c0_11, %c0_12, %c0_13] : memref<4x16x128xf32, #tpu.memory_space<vmem>>, vector<4x16x128xf32>
    %22 = vector.extract_strided_slice %21 {offsets = [0, 0, 0], sizes = [4, 16, 64], strides = [1, 1, 1]} : vector<4x16x128xf32> to vector<4x16x64xf32>
    %23 = vector.extract_strided_slice %21 {offsets = [0, 0, 64], sizes = [4, 16, 64], strides = [1, 1, 1]} : vector<4x16x128xf32> to vector<4x16x64xf32>
    %24 = vector.shape_cast %0 : vector<16x64xf32> to vector<1x16x64xf32>
    %25 = vector.broadcast %24 : vector<1x16x64xf32> to vector<4x16x64xf32>
    %26 = arith.mulf %22, %25 : vector<4x16x64xf32>
    %27 = vector.shape_cast %1 : vector<16x64xf32> to vector<1x16x64xf32>
    %28 = vector.broadcast %27 : vector<1x16x64xf32> to vector<4x16x64xf32>
    %29 = arith.mulf %23, %28 : vector<4x16x64xf32>
    %30 = arith.subf %26, %29 : vector<4x16x64xf32>
    %c0_14 = arith.constant 0 : index
    %c0_15 = arith.constant 0 : index
    %c0_16 = arith.constant 0 : index
    %31 = vector.load %arg7[%c0_14, %c0_15, %c0_16] : memref<4x16x128xf32, #tpu.memory_space<vmem>>, vector<4x16x64xf32>
    tpu.vector_store %arg7[%c0_14, %c0_15, %c0_16], %30 {strides = array<i32>} : memref<4x16x128xf32, #tpu.memory_space<vmem>>, vector<4x16x64xf32>,
    %32 = vector.shape_cast %0 : vector<16x64xf32> to vector<1x16x64xf32>
    %33 = vector.broadcast %32 : vector<1x16x64xf32> to vector<4x16x64xf32>
    %34 = arith.mulf %23, %33 : vector<4x16x64xf32>
    %35 = vector.shape_cast %1 : vector<16x64xf32> to vector<1x16x64xf32>
    %36 = vector.broadcast %35 : vector<1x16x64xf32> to vector<4x16x64xf32>
    %37 = arith.mulf %22, %36 : vector<4x16x64xf32>
    %38 = arith.addf %34, %37 : vector<4x16x64xf32>
    %c0_17 = arith.constant 0 : index
    %c0_18 = arith.constant 0 : index
    %c64_19 = arith.constant 64 : index
    %39 = vector.load %arg7[%c0_17, %c0_18, %c64_19] : memref<4x16x128xf32, #tpu.memory_space<vmem>>, vector<4x16x64xf32>
    tpu.vector_store %arg7[%c0_17, %c0_18, %c64_19], %38 {strides = array<i32>} : memref<4x16x128xf32, #tpu.memory_space<vmem>>, vector<4x16x64xf32>,
    return
  }
  func.func @transform_0(%arg0: i32, %arg1: i32) -> (i32, i32) {
    %c0_i32 = arith.constant 0 : i32
    %c0_i32_0 = arith.constant 0 : i32
    return %arg0, %c0_i32 : i32, i32
  }
  func.func @transform_1(%arg0: i32, %arg1: i32) -> (i32, i32) {
    %c0_i32 = arith.constant 0 : i32
    %c0_i32_0 = arith.constant 0 : i32
    return %arg0, %c0_i32 : i32, i32
  }
  func.func @transform_2(%arg0: i32, %arg1: i32) -> (i32, i32, i32) {
    %c0_i32 = arith.constant 0 : i32
    %c0_i32_0 = arith.constant 0 : i32
    return %arg1, %arg0, %c0_i32 : i32, i32, i32
  }
  func.func @transform_3(%arg0: i32, %arg1: i32) -> (i32, i32, i32) {
    %c0_i32 = arith.constant 0 : i32
    %c0_i32_0 = arith.constant 0 : i32
    return %arg1, %arg0, %c0_i32 : i32, i32, i32
  }
  func.func @transform_4(%arg0: i32, %arg1: i32) -> (i32, i32, i32) {
    %c0_i32 = arith.constant 0 : i32
    %c0_i32_0 = arith.constant 0 : i32
    return %arg1, %arg0, %c0_i32 : i32, i32, i32
  }
  func.func @transform_5(%arg0: i32, %arg1: i32) -> (i32, i32, i32) {
    %c0_i32 = arith.constant 0 : i32
    %c0_i32_0 = arith.constant 0 : i32
    return %arg1, %arg0, %c0_i32 : i32, i32, i32
  }
}

</mosaic_0001>

<llo_original>
// kernel: tpu_custom_call.1
$region0: #{tpu_custom_call.1}
  #allocation0 [shape = 'u32[]', space=smem, size = 0x4, offset = 0x4, fixed_abs, tag = 'smem constant byte address 0x4 - core index']
  #allocation1 [shape = 'u32[72,128]{1,0:T(1,128)}', space=vmem, size = 0x9000, scoped, tag = 'internal scratch']
  %s0 = inlined_call_operand.hbm [shape: f32[16,64], index: 0, kind: input, shape index: {}]
  %s1 = inlined_call_operand.hbm [shape: f32[16,64], index: 1, kind: input, shape index: {}]
  %s2 = inlined_call_operand.hbm [shape: f32[8,16,128], index: 2, kind: input, shape index: {}]
  %s3 = inlined_call_operand.hbm [shape: f32[8,16,128], index: 3, kind: input, shape index: {}]
  %s4 = inlined_call_operand.hbm [shape: f32[8,16,128], index: 4, kind: output, shape index: {0}]
  %s5 = inlined_call_operand.hbm [shape: f32[8,16,128], index: 5, kind: output, shape index: {1}]
  %6 = xla_tuple %s4, %s5
  %s7 = sld [smem:[#allocation0]]
  $region73: #{tpu_custom_call.1} parent=0
    _
  %s9 = ssub.s32 1, %s7
  %s10 = scalar_select 0, %s9, %s7
  $region1: #{tpu_custom_call.1} parent=0
    #allocation2 [shape = 'u8[8192]{0}', space=vmem, size = 0x2000, scoped, tag = 'input window, operand 0, single buffered']
    #allocation3 [shape = 's32[2]{0}', space=sflag, size = 0x8, scoped, tag = 'scoped memory for tpu_custom_call.1']
    #allocation4 [shape = 's32[2]{0}', space=sflag, size = 0x8, scoped, tag = 'scoped memory for tpu_custom_call.1']
    #allocation5 [shape = 'u8[8192]{0}', space=vmem, size = 0x2000, scoped, tag = 'input window, operand 1, single buffered']
    #allocation6 [shape = 's32[1]{0}', space=sflag, size = 0x4, scoped, tag = 'scoped memory for tpu_custom_call.1']
    #allocation7 [shape = 'u8[65536]{0}', space=vmem, size = 0x10000, scoped, tag = 'input window, operand 2']
    #allocation8 [shape = 'u8[65536]{0}', space=vmem, size = 0x10000, scoped, tag = 'input window, operand 3']
    #allocation9 [shape = 'u8[65536]{0}', space=vmem, size = 0x10000, scoped, tag = 'output window, operand 0']
    #allocation10 [shape = 'u8[65536]{0}', space=vmem, size = 0x10000, scoped, tag = 'output window, operand 1']
    #allocation11 [shape = 's32[2]{0}', space=sflag, size = 0x8, scoped, tag = 'scoped memory for tpu_custom_call.1']
    %11 = vsyncpa [#allocation3], 0
    %12 = vsyncpa [#allocation6], 0
    %13 = vsyncpa [#allocation4], 0
    %s14 = scalar_lea.sflag [#allocation4], 1
    %15 = vsyncpa %s14, 0
    %16 = vsyncpa [#allocation11], 0
    %s17 = scalar_lea.sflag [#allocation11], 1
    %18 = vsyncpa %s17, 0
    loop: start=0, step=1, limit=4
    $region2: #{tpu_custom_call.1} parent=1 // loop_pre_header
      _
    $region3: #{tpu_custom_call.1} parent=1 // loop_header
      %s20 = sphi 0, %s24
      %p21 = scmp.ge.s32.totalorder %s20, 4
      %s27 = sphi 0, %s39
      %s28 = sphi 0, %s35
      %s29 = sphi 0, %s27
      %s30 = sphi 0, %s28
      %s31 = sphi 0, %s29
      %s32 = sphi 0, %s30
      %s42 = sphi 0, %s44
      %s45 = sphi 0, %s42
      %s46 = sphi 0, %s45
      %s62 = sphi 0, %s46
      %s68 = sphi 0, %s70
      %s71 = sphi 0, %s68
      %s72 = sphi 0, %s71
      %s88 = sphi 0, %s72
      %s96 = sphi 0, %s98
      %s99 = sphi 0, %s96
      %s100 = sphi 0, %s99
      %s116 = sphi 0, %s100
      %s124 = sphi 0, %s126
      %s127 = sphi 0, %s124
      %s128 = sphi 0, %s127
      %s144 = sphi 0, %s128
      %s152 = sphi 0, %s154
      %s155 = sphi 0, %s152
      %s156 = sphi 0, %s155
      %s172 = sphi 0, %s156
      %s180 = sphi 0, %s182
      %s183 = sphi 0, %s180
      %s184 = sphi 0, %s183
      %s200 = sphi 0, %s184
    $region4: #{tpu_custom_call.1} parent=1 // loop_header_branch
      %23 = sbr.rel (%p21) target = $region8
    $region5: #{tpu_custom_call.1} parent=1 // loop_body
      %s25 = ssub.s32 %s20, 1
      %s26 = ssub.s32 %s20, 2
      %s33 = sadd.s32 1, %s28
      %p34 = scmp.ge.s32.totalorder %s33, 2
      %s35 = scalar_select %p34, 0, %s33
      %s36 = sadd.s32 1, %s27
      %s37 = scalar_select %p34, %s36, %s27
      %p38 = scmp.ge.s32.totalorder %s37, 1
      %s39 = scalar_select %p38, 0, %s37
      %s40 = ssub.s32 %s27, %s39
      %p41 = scmp.eq.s32.totalorder %s40, 0
      %s43 = sadd.s32 %s42, 1
      %s44 = scalar_select %p41, %s42, %s43
      %p47 = pneg %p41
      %p48 = scmp.eq.s32.totalorder %s20, 1
      %p49 = por %p47, %p48
      %p50 = scmp.ne.s32.totalorder %s42, %s45
      %p51 = scmp.eq.s32.totalorder %s20, 0
      %p52 = por %p50, %p51
      %p53 = scmp.ne.s32.totalorder %s42, %s45
      %p54 = scmp.eq.s32.totalorder %s25, 1
      %p55 = por %p53, %p54
      %p56 = scmp.ne.s32.totalorder %s45, %s46
      %p57 = scmp.eq.s32.totalorder %s25, 0
      %p58 = por %p56, %p57
      %p59 = scmp.ne.s32.totalorder %s45, %s46
      %p60 = scmp.eq.s32.totalorder %s26, 1
      %p61 = por %p59, %p60
      %p63 = scmp.ne.s32.totalorder %s46, %s62
      %p64 = scmp.eq.s32.totalorder %s26, 0
      %p65 = por %p63, %p64
      %s66 = ssub.s32 %s27, %s39
      %p67 = scmp.eq.s32.totalorder %s66, 0
      %s69 = sadd.s32 %s68, 1
      %s70 = scalar_select %p67, %s68, %s69
      %p73 = pneg %p67
      %p74 = scmp.eq.s32.totalorder %s20, 1
      %p75 = por %p73, %p74
      %p76 = scmp.ne.s32.totalorder %s68, %s71
      %p77 = scmp.eq.s32.totalorder %s20, 0
      %p78 = por %p76, %p77
      %p79 = scmp.ne.s32.totalorder %s68, %s71
      %p80 = scmp.eq.s32.totalorder %s25, 1
      %p81 = por %p79, %p80
      %p82 = scmp.ne.s32.totalorder %s71, %s72
      %p83 = scmp.eq.s32.totalorder %s25, 0
      %p84 = por %p82, %p83
      %p85 = scmp.ne.s32.totalorder %s71, %s72
      %p86 = scmp.eq.s32.totalorder %s26, 1
      %p87 = por %p85, %p86
      %p89 = scmp.ne.s32.totalorder %s72, %s88
      %p90 = scmp.eq.s32.totalorder %s26, 0
      %p91 = por %p89, %p90
      %s92 = ssub.s32 %s28, %s35
      %s93 = ssub.s32 %s27, %s39
      %s94 = sor.u32 %s92, %s93
      %p95 = scmp.eq.s32.totalorder %s94, 0
      %s97 = sadd.s32 %s96, 1
      %s98 = scalar_select %p95, %s96, %s97
      %p101 = pneg %p95
      %p102 = scmp.eq.s32.totalorder %s20, 1
      %p103 = por %p101, %p102
      %p104 = scmp.ne.s32.totalorder %s96, %s99
      %p105 = scmp.eq.s32.totalorder %s20, 0
      %p106 = por %p104, %p105
      %p107 = scmp.ne.s32.totalorder %s96, %s99
      %p108 = scmp.eq.s32.totalorder %s25, 1
      %p109 = por %p107, %p108
      %p110 = scmp.ne.s32.totalorder %s99, %s100
      %p111 = scmp.eq.s32.totalorder %s25, 0
      %p112 = por %p110, %p111
      %p113 = scmp.ne.s32.totalorder %s99, %s100
      %p114 = scmp.eq.s32.totalorder %s26, 1
      %p115 = por %p113, %p114
      %p117 = scmp.ne.s32.totalorder %s100, %s116
      %p118 = scmp.eq.s32.totalorder %s26, 0
      %p119 = por %p117, %p118
      %s120 = ssub.s32 %s28, %s35
      %s121 = ssub.s32 %s27, %s39
      %s122 = sor.u32 %s120, %s121
      %p123 = scmp.eq.s32.totalorder %s122, 0
      %s125 = sadd.s32 %s124, 1
      %s126 = scalar_select %p123, %s124, %s125
      %p129 = pneg %p123
      %p130 = scmp.eq.s32.totalorder %s20, 1
      %p131 = por %p129, %p130
      %p132 = scmp.ne.s32.totalorder %s124, %s127
      %p133 = scmp.eq.s32.totalorder %s20, 0
      %p134 = por %p132, %p133
      %p135 = scmp.ne.s32.totalorder %s124, %s127
      %p136 = scmp.eq.s32.totalorder %s25, 1
      %p137 = por %p135, %p136
      %p138 = scmp.ne.s32.totalorder %s127, %s128
      %p139 = scmp.eq.s32.totalorder %s25, 0
      %p140 = por %p138, %p139
      %p141 = scmp.ne.s32.totalorder %s127, %s128
      %p142 = scmp.eq.s32.totalorder %s26, 1
      %p143 = por %p141, %p142
      %p145 = scmp.ne.s32.totalorder %s128, %s144
      %p146 = scmp.eq.s32.totalorder %s26, 0
      %p147 = por %p145, %p146
      %s148 = ssub.s32 %s28, %s35
      %s149 = ssub.s32 %s27, %s39
      %s150 = sor.u32 %s148, %s149
      %p151 = scmp.eq.s32.totalorder %s150, 0
      %s153 = sadd.s32 %s152, 1
      %s154 = scalar_select %p151, %s152, %s153
      %p157 = pneg %p151
      %p158 = scmp.eq.s32.totalorder %s20, 1
      %p159 = por %p157, %p158
      %p160 = scmp.ne.s32.totalorder %s152, %s155
      %p161 = scmp.eq.s32.totalorder %s20, 0
      %p162 = por %p160, %p161
      %p163 = scmp.ne.s32.totalorder %s152, %s155
      %p164 = scmp.eq.s32.totalorder %s25, 1
      %p165 = por %p163, %p164
      %p166 = scmp.ne.s32.totalorder %s155, %s156
      %p167 = scmp.eq.s32.totalorder %s25, 0
      %p168 = por %p166, %p167
      %p169 = scmp.ne.s32.totalorder %s155, %s156
      %p170 = scmp.eq.s32.totalorder %s26, 1
      %p171 = por %p169, %p170
      %p173 = scmp.ne.s32.totalorder %s156, %s172
      %p174 = scmp.eq.s32.totalorder %s26, 0
      %p175 = por %p173, %p174
      %s176 = ssub.s32 %s28, %s35
      %s177 = ssub.s32 %s27, %s39
      %s178 = sor.u32 %s176, %s177
      %p179 = scmp.eq.s32.totalorder %s178, 0
      %s181 = sadd.s32 %s180, 1
      %s182 = scalar_select %p179, %s180, %s181
      %p185 = pneg %p179
      %p186 = scmp.eq.s32.totalorder %s20, 1
      %p187 = por %p185, %p186
      %p188 = scmp.ne.s32.totalorder %s180, %s183
      %p189 = scmp.eq.s32.totalorder %s20, 0
      %p190 = por %p188, %p189
      %p191 = scmp.ne.s32.totalorder %s180, %s183
      %p192 = scmp.eq.s32.totalorder %s25, 1
      %p193 = por %p191, %p192
      %p194 = scmp.ne.s32.totalorder %s183, %s184
      %p195 = scmp.eq.s32.totalorder %s25, 0
      %p196 = por %p194, %p195
      %p197 = scmp.ne.s32.totalorder %s183, %s184
      %p198 = scmp.eq.s32.totalorder %s26, 1
      %p199 = por %p197, %p198
      %p201 = scmp.ne.s32.totalorder %s184, %s200
      %p202 = scmp.eq.s32.totalorder %s26, 0
      %p203 = por %p201, %p202
      %p204 = scmp.le.s32.totalorder 1, %s20
      %p205 = scmp.lt.s32.totalorder %s20, 3
      %p206 = pnand %p204, %p205
      %p207 = pneg %p206
      // Predicated region
      $region9: #{tpu_custom_call.1} parent=5 // pred_check
        _
      $region10: #{tpu_custom_call.1} parent=5 // pred_check_branch
        %209 = sbr.rel (%p206) target = $region12
      $region11: #{tpu_custom_call.1} parent=5 // pred_region
        %s210 = ssub.s32 %s20, 1
        // Predicated region
        $region13: #{tpu_custom_call.1} parent=11 // pred_check
          %p211 = pneg %p58
        $region14: #{tpu_custom_call.1} parent=11 // pred_check_branch
          %213 = sbr.rel (%p211) target = $region16
        $region15: #{tpu_custom_call.1} parent=11 // pred_region
          %s214 = smul.u32 2, %s29
          %216 = vsyncadd [#allocation3], 0
          %s217 = smul.addr %s214, 8
          %s218 = scalar_lea.hbm %s0, %s217
          %s219 = sshll.u32 %s218, 4
          %s220 = int_to_ptr.hbm [resolvable:$true] %s219
          %s221 = sshll.u32 [#allocation2], 4
          %s222 = int_to_ptr.vmem [resolvable:$true] %s221
          %227 = dma.hbm_to_vmem [thread:$0]  %s220, 256, %s222, [#allocation3], 128, 128, 8
        $region16: #{tpu_custom_call.1} parent=11 // pred_fallthru
          _
        // Predicated region
        $region17: #{tpu_custom_call.1} parent=11 // pred_check
          %p228 = pneg %p84
        $region18: #{tpu_custom_call.1} parent=11 // pred_check_branch
          %230 = sbr.rel (%p228) target = $region20
        $region19: #{tpu_custom_call.1} parent=11 // pred_region
          %s231 = smul.u32 2, %s29
          %233 = vsyncadd [#allocation6], 0
          %s234 = smul.addr %s231, 8
          %s235 = scalar_lea.hbm %s1, %s234
          %s236 = sshll.u32 %s235, 4
          %s237 = int_to_ptr.hbm [resolvable:$true] %s236
          %s238 = sshll.u32 [#allocation5], 4
          %s239 = int_to_ptr.vmem [resolvable:$true] %s238
          %244 = dma.hbm_to_vmem [thread:$0]  %s237, 256, %s239, [#allocation6], 128, 128, 8
        $region20: #{tpu_custom_call.1} parent=11 // pred_fallthru
          _
      $region12: #{tpu_custom_call.1} parent=5 // pred_fallthru
        _
      %p245 = scmp.lt.s32.totalorder %s20, 2
      // Predicated region
      $region21: #{tpu_custom_call.1} parent=5 // pred_check
        %p246 = pneg %p245
      $region22: #{tpu_custom_call.1} parent=5 // pred_check_branch
        %248 = sbr.rel (%p246) target = $region24
      $region23: #{tpu_custom_call.1} parent=5 // pred_region
        // Predicated region
        $region25: #{tpu_custom_call.1} parent=23 // pred_check
          %p249 = pneg %p106
        $region26: #{tpu_custom_call.1} parent=23 // pred_check_branch
          %251 = sbr.rel (%p249) target = $region28
        $region27: #{tpu_custom_call.1} parent=23 // pred_region
          %s252 = sand.u32 %s20, 1
          %s253 = scalar_lea.sflag [#allocation3], %s252
          %s254 = sand.u32 %s96, 1
          %s255 = smul.addr %s254, 64
          %s256 = scalar_lea.vmem [#allocation7], %s255
          %s257 = smul.u32 4, %s28
          %s258 = smul.u32 2, %s27
          %260 = vsyncadd %s253, 0
          %s261 = smul.addr %s257, 2
          %s262 = sadd.s32 %s258, %s261
          %s263 = smul.addr %s262, 8
          %s264 = scalar_lea.hbm %s2, %s263
          %s265 = sshll.u32 %s264, 4
          %s266 = int_to_ptr.hbm [resolvable:$true] %s265
          %s267 = sshll.u32 %s256, 4
          %s268 = int_to_ptr.vmem [resolvable:$true] %s267
          %273 = dma.hbm_to_vmem [thread:$0]  %s266, 1024, %s268, %s253, 128, 128, 8
        $region28: #{tpu_custom_call.1} parent=23 // pred_fallthru
          _
        // Predicated region
        $region29: #{tpu_custom_call.1} parent=23 // pred_check
          %p274 = pneg %p134
        $region30: #{tpu_custom_call.1} parent=23 // pred_check_branch
          %276 = sbr.rel (%p274) target = $region32
        $region31: #{tpu_custom_call.1} parent=23 // pred_region
          %s277 = sand.u32 %s20, 1
          %s278 = scalar_lea.sflag [#allocation3], %s277
          %s279 = sand.u32 %s124, 1
          %s280 = smul.addr %s279, 64
          %s281 = scalar_lea.vmem [#allocation8], %s280
          %s282 = smul.u32 4, %s28
          %s283 = smul.u32 2, %s27
          %285 = vsyncadd %s278, 0
          %s286 = smul.addr %s282, 2
          %s287 = sadd.s32 %s283, %s286
          %s288 = smul.addr %s287, 8
          %s289 = scalar_lea.hbm %s3, %s288
          %s290 = sshll.u32 %s289, 4
          %s291 = int_to_ptr.hbm [resolvable:$true] %s290
          %s292 = sshll.u32 %s281, 4
          %s293 = int_to_ptr.vmem [resolvable:$true] %s292
          %298 = dma.hbm_to_vmem [thread:$0]  %s291, 1024, %s293, %s278, 128, 128, 8
        $region32: #{tpu_custom_call.1} parent=23 // pred_fallthru
          _
      $region24: #{tpu_custom_call.1} parent=5 // pred_fallthru
        _
      %p299 = scmp.le.s32.totalorder 1, %s20
      %p300 = scmp.lt.s32.totalorder %s20, 3
      %p301 = pnand %p299, %p300
      %p302 = pneg %p301
      // Predicated region
      $region33: #{tpu_custom_call.1} parent=5 // pred_check
        _
      $region34: #{tpu_custom_call.1} parent=5 // pred_check_branch
        %304 = sbr.rel (%p301) target = $region36
      $region35: #{tpu_custom_call.1} parent=5 // pred_region
        %s305 = ssub.s32 %s20, 1
        // Predicated region
        $region37: #{tpu_custom_call.1} parent=35 // pred_check
          %p306 = pneg %p58
        $region38: #{tpu_custom_call.1} parent=35 // pred_check_branch
          %308 = sbr.rel (%p306) target = $region40
        $region39: #{tpu_custom_call.1} parent=35 // pred_region
          %310 = dma.done [#allocation3], 256
        $region40: #{tpu_custom_call.1} parent=35 // pred_fallthru
          _
        // Predicated region
        $region41: #{tpu_custom_call.1} parent=35 // pred_check
          %p311 = pneg %p84
        $region42: #{tpu_custom_call.1} parent=35 // pred_check_branch
          %313 = sbr.rel (%p311) target = $region44
        $region43: #{tpu_custom_call.1} parent=35 // pred_region
          %315 = dma.done [#allocation6], 256
        $region44: #{tpu_custom_call.1} parent=35 // pred_fallthru
          _
        %s316 = sand.u32 %s25, 1
        %s317 = scalar_lea.sflag [#allocation3], %s316
        %s318 = sand.u32 %s99, 1
        %s319 = smul.addr %s318, 64
        %s320 = scalar_lea.vmem [#allocation7], %s319
        // Predicated region
        $region45: #{tpu_custom_call.1} parent=35 // pred_check
          %p321 = pneg %p112
        $region46: #{tpu_custom_call.1} parent=35 // pred_check_branch
          %323 = sbr.rel (%p321) target = $region48
        $region47: #{tpu_custom_call.1} parent=35 // pred_region
          %325 = dma.done %s317, 1024
        $region48: #{tpu_custom_call.1} parent=35 // pred_fallthru
          _
        %s326 = sand.u32 %s25, 1
        %s327 = scalar_lea.sflag [#allocation3], %s326
        %s328 = sand.u32 %s127, 1
        %s329 = smul.addr %s328, 64
        %s330 = scalar_lea.vmem [#allocation8], %s329
        // Predicated region
        $region49: #{tpu_custom_call.1} parent=35 // pred_check
          %p331 = pneg %p140
        $region50: #{tpu_custom_call.1} parent=35 // pred_check_branch
          %333 = sbr.rel (%p331) target = $region52
        $region51: #{tpu_custom_call.1} parent=35 // pred_region
          %335 = dma.done %s327, 1024
        $region52: #{tpu_custom_call.1} parent=35 // pred_fallthru
          _
        %p336 = pneg %p58
        %p337 = pneg %p55
        %p338 = pneg %p84
        %p339 = pneg %p81
        %s340 = sand.u32 %s25, 1
        %s341 = scalar_lea.sflag [#allocation3], %s340
        %s342 = sand.u32 %s99, 1
        %s343 = smul.addr %s342, 64
        %s344 = scalar_lea.vmem [#allocation7], %s343
        %p345 = pneg %p112
        %p346 = pneg %p109
        %s347 = sand.u32 %s25, 1
        %s348 = scalar_lea.sflag [#allocation3], %s347
        %s349 = sand.u32 %s127, 1
        %s350 = smul.addr %s349, 64
        %s351 = scalar_lea.vmem [#allocation8], %s350
        %p352 = pneg %p140
        %p353 = pneg %p137
        %p354 = pneg %p168
        %p355 = pneg %p165
        %s356 = sand.u32 %s155, 1
        %s357 = scalar_lea.sflag [#allocation4], %s356
        %s358 = sand.u32 %s155, 1
        %s359 = smul.addr %s358, 64
        %s360 = scalar_lea.vmem [#allocation9], %s359
        %p361 = pneg %p196
        %p362 = pneg %p193
        %s363 = sand.u32 %s183, 1
        %s364 = scalar_lea.sflag [#allocation11], %s363
        %s365 = sand.u32 %s183, 1
        %s366 = smul.addr %s365, 64
        %s367 = scalar_lea.vmem [#allocation10], %s366
        %s368 = smul.u32 2, %s29
        %s369 = smul.u32 2, %s29
        %s370 = smul.u32 4, %s30
        %s371 = smul.u32 2, %s29
        %s372 = smul.u32 4, %s30
        %s373 = smul.u32 2, %s29
        %s374 = smul.u32 4, %s30
        %s375 = smul.u32 2, %s29
        %s376 = smul.u32 4, %s30
        %s377 = smul.u32 2, %s29
        %v378 = vld [vmem:[#allocation2] sm:$0xff]
        %v379 = vld [vmem:[#allocation2 + $0x8] sm:$0xff]
        %v380 = vld [vmem:[#allocation5] sm:$0xff]
        %v381 = vld [vmem:[#allocation5 + $0x8] sm:$0xff]
        %v382 = vld [vmem:[%s320] sm:$0xff]
        %v383 = vld [vmem:[%s320 + $0x8] sm:$0xff]
        %v384 = vld [vmem:[%s320 + $0x10] sm:$0xff]
        %v385 = vld [vmem:[%s320 + $0x18] sm:$0xff]
        %v386 = vld [vmem:[%s320 + $0x20] sm:$0xff]
        %v387 = vld [vmem:[%s320 + $0x28] sm:$0xff]
        %v388 = vld [vmem:[%s320 + $0x30] sm:$0xff]
        %v389 = vld [vmem:[%s320 + $0x38] sm:$0xff]
        %v390 = vmul.f32 %v382, %v378
        %v391 = vmul.f32 %v383, %v379
        %v392 = vmul.f32 %v384, %v378
        %v393 = vmul.f32 %v385, %v379
        %v394 = vmul.f32 %v386, %v378
        %v395 = vmul.f32 %v387, %v379
        %v396 = vmul.f32 %v388, %v378
        %v397 = vmul.f32 %v389, %v379
        %400 = vrot.lane.b32.xlu0 %v380, 64
        %v401 = vpop.permute.xlu0 %400
        %402 = vrot.lane.b32.xlu0 %v381, 64
        %v403 = vpop.permute.xlu0 %402
        %v406 = vmul.f32 %v382, %v401
        %v407 = vmul.f32 %v383, %v403
        %v408 = vmul.f32 %v384, %v401
        %v409 = vmul.f32 %v385, %v403
        %v410 = vmul.f32 %v386, %v401
        %v411 = vmul.f32 %v387, %v403
        %v412 = vmul.f32 %v388, %v401
        %v413 = vmul.f32 %v389, %v403
        %422 = vrot.lane.b32.xlu0 %v406, 64
        %v423 = vpop.permute.xlu0 %422
        %424 = vrot.lane.b32.xlu0 %v407, 64
        %v425 = vpop.permute.xlu0 %424
        %426 = vrot.lane.b32.xlu0 %v408, 64
        %v427 = vpop.permute.xlu0 %426
        %428 = vrot.lane.b32.xlu0 %v409, 64
        %v429 = vpop.permute.xlu0 %428
        %430 = vrot.lane.b32.xlu0 %v410, 64
        %v431 = vpop.permute.xlu0 %430
        %432 = vrot.lane.b32.xlu0 %v411, 64
        %v433 = vpop.permute.xlu0 %432
        %434 = vrot.lane.b32.xlu0 %v412, 64
        %v435 = vpop.permute.xlu0 %434
        %436 = vrot.lane.b32.xlu0 %v413, 64
        %v437 = vpop.permute.xlu0 %436
        %v446 = vsub.f32 %v390, %v423
        %v447 = vsub.f32 %v391, %v425
        %v448 = vsub.f32 %v392, %v427
        %v449 = vsub.f32 %v393, %v429
        %v450 = vsub.f32 %v394, %v431
        %v451 = vsub.f32 %v395, %v433
        %v452 = vsub.f32 %v396, %v435
        %v453 = vsub.f32 %v397, %v437
        %vm454 = vcmask 523264
        %455 = vst.msk [vmem:[%s360] sm:$0xff] %vm454, %v446
        %456 = vst.msk [vmem:[%s360 + $0x8] sm:$0xff] %vm454, %v447
        %457 = vst.msk [vmem:[%s360 + $0x10] sm:$0xff] %vm454, %v448
        %458 = vst.msk [vmem:[%s360 + $0x18] sm:$0xff] %vm454, %v449
        %459 = vst.msk [vmem:[%s360 + $0x20] sm:$0xff] %vm454, %v450
        %460 = vst.msk [vmem:[%s360 + $0x28] sm:$0xff] %vm454, %v451
        %461 = vst.msk [vmem:[%s360 + $0x30] sm:$0xff] %vm454, %v452
        %462 = vst.msk [vmem:[%s360 + $0x38] sm:$0xff] %vm454, %v453
        %465 = vrot.lane.b32.xlu0 %v378, 64
        %v466 = vpop.permute.xlu0 %465
        %467 = vrot.lane.b32.xlu0 %v379, 64
        %v468 = vpop.permute.xlu0 %467
        %v471 = vmul.f32 %v382, %v466
        %v472 = vmul.f32 %v383, %v468
        %v473 = vmul.f32 %v384, %v466
        %v474 = vmul.f32 %v385, %v468
        %v475 = vmul.f32 %v386, %v466
        %v476 = vmul.f32 %v387, %v468
        %v477 = vmul.f32 %v388, %v466
        %v478 = vmul.f32 %v389, %v468
        %v479 = vmul.f32 %v382, %v380
        %v480 = vmul.f32 %v383, %v381
        %v481 = vmul.f32 %v384, %v380
        %v482 = vmul.f32 %v385, %v381
        %v483 = vmul.f32 %v386, %v380
        %v484 = vmul.f32 %v387, %v381
        %v485 = vmul.f32 %v388, %v380
        %v486 = vmul.f32 %v389, %v381
        %495 = vrot.lane.b32.xlu0 %v479, 64
        %v496 = vpop.permute.xlu0 %495
        %497 = vrot.lane.b32.xlu0 %v480, 64
        %v498 = vpop.permute.xlu0 %497
        %499 = vrot.lane.b32.xlu0 %v481, 64
        %v500 = vpop.permute.xlu0 %499
        %501 = vrot.lane.b32.xlu0 %v482, 64
        %v502 = vpop.permute.xlu0 %501
        %503 = vrot.lane.b32.xlu0 %v483, 64
        %v504 = vpop.permute.xlu0 %503
        %505 = vrot.lane.b32.xlu0 %v484, 64
        %v506 = vpop.permute.xlu0 %505
        %507 = vrot.lane.b32.xlu0 %v485, 64
        %v508 = vpop.permute.xlu0 %507
        %509 = vrot.lane.b32.xlu0 %v486, 64
        %v510 = vpop.permute.xlu0 %509
        %v519 = vadd.f32 %v471, %v496
        %v520 = vadd.f32 %v472, %v498
        %v521 = vadd.f32 %v473, %v500
        %v522 = vadd.f32 %v474, %v502
        %v523 = vadd.f32 %v475, %v504
        %v524 = vadd.f32 %v476, %v506
        %v525 = vadd.f32 %v477, %v508
        %v526 = vadd.f32 %v478, %v510
        %vm527 = vcmask 1048064
        %528 = vst.msk [vmem:[%s360] sm:$0xff] %vm527, %v519
        %529 = vst.msk [vmem:[%s360 + $0x8] sm:$0xff] %vm527, %v520
        %530 = vst.msk [vmem:[%s360 + $0x10] sm:$0xff] %vm527, %v521
        %531 = vst.msk [vmem:[%s360 + $0x18] sm:$0xff] %vm527, %v522
        %532 = vst.msk [vmem:[%s360 + $0x20] sm:$0xff] %vm527, %v523
        %533 = vst.msk [vmem:[%s360 + $0x28] sm:$0xff] %vm527, %v524
        %534 = vst.msk [vmem:[%s360 + $0x30] sm:$0xff] %vm527, %v525
        %535 = vst.msk [vmem:[%s360 + $0x38] sm:$0xff] %vm527, %v526
        %v536 = vld [vmem:[%s330] sm:$0xff]
        %v537 = vld [vmem:[%s330 + $0x8] sm:$0xff]
        %v538 = vld [vmem:[%s330 + $0x10] sm:$0xff]
        %v539 = vld [vmem:[%s330 + $0x18] sm:$0xff]
        %v540 = vld [vmem:[%s330 + $0x20] sm:$0xff]
        %v541 = vld [vmem:[%s330 + $0x28] sm:$0xff]
        %v542 = vld [vmem:[%s330 + $0x30] sm:$0xff]
        %v543 = vld [vmem:[%s330 + $0x38] sm:$0xff]
        %v544 = vmul.f32 %v536, %v378
        %v545 = vmul.f32 %v537, %v379
        %v546 = vmul.f32 %v538, %v378
        %v547 = vmul.f32 %v539, %v379
        %v548 = vmul.f32 %v540, %v378
        %v549 = vmul.f32 %v541, %v379
        %v550 = vmul.f32 %v542, %v378
        %v551 = vmul.f32 %v543, %v379
        %v552 = vmul.f32 %v536, %v401
        %v553 = vmul.f32 %v537, %v403
        %v554 = vmul.f32 %v538, %v401
        %v555 = vmul.f32 %v539, %v403
        %v556 = vmul.f32 %v540, %v401
        %v557 = vmul.f32 %v541, %v403
        %v558 = vmul.f32 %v542, %v401
        %v559 = vmul.f32 %v543, %v403
        %568 = vrot.lane.b32.xlu0 %v552, 64
        %v569 = vpop.permute.xlu0 %568
        %570 = vrot.lane.b32.xlu0 %v553, 64
        %v571 = vpop.permute.xlu0 %570
        %572 = vrot.lane.b32.xlu0 %v554, 64
        %v573 = vpop.permute.xlu0 %572
        %574 = vrot.lane.b32.xlu0 %v555, 64
        %v575 = vpop.permute.xlu0 %574
        %576 = vrot.lane.b32.xlu0 %v556, 64
        %v577 = vpop.permute.xlu0 %576
        %578 = vrot.lane.b32.xlu0 %v557, 64
        %v579 = vpop.permute.xlu0 %578
        %580 = vrot.lane.b32.xlu0 %v558, 64
        %v581 = vpop.permute.xlu0 %580
        %582 = vrot.lane.b32.xlu0 %v559, 64
        %v583 = vpop.permute.xlu0 %582
        %v592 = vsub.f32 %v544, %v569
        %v593 = vsub.f32 %v545, %v571
        %v594 = vsub.f32 %v546, %v573
        %v595 = vsub.f32 %v547, %v575
        %v596 = vsub.f32 %v548, %v577
        %v597 = vsub.f32 %v549, %v579
        %v598 = vsub.f32 %v550, %v581
        %v599 = vsub.f32 %v551, %v583
        %600 = vst.msk [vmem:[%s367] sm:$0xff] %vm454, %v592
        %601 = vst.msk [vmem:[%s367 + $0x8] sm:$0xff] %vm454, %v593
        %602 = vst.msk [vmem:[%s367 + $0x10] sm:$0xff] %vm454, %v594
        %603 = vst.msk [vmem:[%s367 + $0x18] sm:$0xff] %vm454, %v595
        %604 = vst.msk [vmem:[%s367 + $0x20] sm:$0xff] %vm454, %v596
        %605 = vst.msk [vmem:[%s367 + $0x28] sm:$0xff] %vm454, %v597
        %606 = vst.msk [vmem:[%s367 + $0x30] sm:$0xff] %vm454, %v598
        %607 = vst.msk [vmem:[%s367 + $0x38] sm:$0xff] %vm454, %v599
        %v608 = vmul.f32 %v536, %v466
        %v609 = vmul.f32 %v537, %v468
        %v610 = vmul.f32 %v538, %v466
        %v611 = vmul.f32 %v539, %v468
        %v612 = vmul.f32 %v540, %v466
        %v613 = vmul.f32 %v541, %v468
        %v614 = vmul.f32 %v542, %v466
        %v615 = vmul.f32 %v543, %v468
        %v616 = vmul.f32 %v536, %v380
        %v617 = vmul.f32 %v537, %v381
        %v618 = vmul.f32 %v538, %v380
        %v619 = vmul.f32 %v539, %v381
        %v620 = vmul.f32 %v540, %v380
        %v621 = vmul.f32 %v541, %v381
        %v622 = vmul.f32 %v542, %v380
        %v623 = vmul.f32 %v543, %v381
        %632 = vrot.lane.b32.xlu0 %v616, 64
        %v633 = vpop.permute.xlu0 %632
        %634 = vrot.lane.b32.xlu0 %v617, 64
        %v635 = vpop.permute.xlu0 %634
        %636 = vrot.lane.b32.xlu0 %v618, 64
        %v637 = vpop.permute.xlu0 %636
        %638 = vrot.lane.b32.xlu0 %v619, 64
        %v639 = vpop.permute.xlu0 %638
        %640 = vrot.lane.b32.xlu0 %v620, 64
        %v641 = vpop.permute.xlu0 %640
        %642 = vrot.lane.b32.xlu0 %v621, 64
        %v643 = vpop.permute.xlu0 %642
        %644 = vrot.lane.b32.xlu0 %v622, 64
        %v645 = vpop.permute.xlu0 %644
        %646 = vrot.lane.b32.xlu0 %v623, 64
        %v647 = vpop.permute.xlu0 %646
        %v656 = vadd.f32 %v608, %v633
        %v657 = vadd.f32 %v609, %v635
        %v658 = vadd.f32 %v610, %v637
        %v659 = vadd.f32 %v611, %v639
        %v660 = vadd.f32 %v612, %v641
        %v661 = vadd.f32 %v613, %v643
        %v662 = vadd.f32 %v614, %v645
        %v663 = vadd.f32 %v615, %v647
        %664 = vst.msk [vmem:[%s367] sm:$0xff] %vm527, %v656
        %665 = vst.msk [vmem:[%s367 + $0x8] sm:$0xff] %vm527, %v657
        %666 = vst.msk [vmem:[%s367 + $0x10] sm:$0xff] %vm527, %v658
        %667 = vst.msk [vmem:[%s367 + $0x18] sm:$0xff] %vm527, %v659
        %668 = vst.msk [vmem:[%s367 + $0x20] sm:$0xff] %vm527, %v660
        %669 = vst.msk [vmem:[%s367 + $0x28] sm:$0xff] %vm527, %v661
        %670 = vst.msk [vmem:[%s367 + $0x30] sm:$0xff] %vm527, %v662
        %671 = vst.msk [vmem:[%s367 + $0x38] sm:$0xff] %vm527, %v663
        %s672 = sand.u32 %s155, 1
        %s673 = scalar_lea.sflag [#allocation4], %s672
        %s674 = sand.u32 %s155, 1
        %s675 = smul.addr %s674, 64
        %s676 = scalar_lea.vmem [#allocation9], %s675
        %s677 = sand.u32 %s183, 1
        %s678 = scalar_lea.sflag [#allocation11], %s677
        %s679 = sand.u32 %s183, 1
        %s680 = smul.addr %s679, 64
        %s681 = scalar_lea.vmem [#allocation10], %s680
        // Predicated region
        $region53: #{tpu_custom_call.1} parent=35 // pred_check
          %p682 = pneg %p165
        $region54: #{tpu_custom_call.1} parent=35 // pred_check_branch
          %684 = sbr.rel (%p682) target = $region56
        $region55: #{tpu_custom_call.1} parent=35 // pred_region
          %s685 = smul.u32 4, %s30
          %s686 = smul.u32 2, %s29
          %688 = vsyncadd %s673, 0
          %s689 = smul.addr %s685, 2
          %s690 = sadd.s32 %s686, %s689
          %s691 = smul.addr %s690, 8
          %s692 = scalar_lea.hbm %s4, %s691
          %s693 = sshll.u32 %s676, 4
          %s694 = int_to_ptr.vmem [resolvable:$true] %s693
          %s695 = sshll.u32 %s692, 4
          %s696 = int_to_ptr.hbm [resolvable:$true] %s695
          %701 = dma.vmem_to_hbm [thread:$0]  %s694, 1024, %s696, %s673, 128, 128, 8
        $region56: #{tpu_custom_call.1} parent=35 // pred_fallthru
          _
        // Predicated region
        $region57: #{tpu_custom_call.1} parent=35 // pred_check
          %p702 = pneg %p193
        $region58: #{tpu_custom_call.1} parent=35 // pred_check_branch
          %704 = sbr.rel (%p702) target = $region60
        $region59: #{tpu_custom_call.1} parent=35 // pred_region
          %s705 = smul.u32 4, %s30
          %s706 = smul.u32 2, %s29
          %708 = vsyncadd %s678, 0
          %s709 = smul.addr %s705, 2
          %s710 = sadd.s32 %s706, %s709
          %s711 = smul.addr %s710, 8
          %s712 = scalar_lea.hbm %s5, %s711
          %s713 = sshll.u32 %s681, 4
          %s714 = int_to_ptr.vmem [resolvable:$true] %s713
          %s715 = sshll.u32 %s712, 4
          %s716 = int_to_ptr.hbm [resolvable:$true] %s715
          %721 = dma.vmem_to_hbm [thread:$0]  %s714, 1024, %s716, %s678, 128, 128, 8
        $region60: #{tpu_custom_call.1} parent=35 // pred_fallthru
          _
      $region36: #{tpu_custom_call.1} parent=5 // pred_fallthru
        _
      %p722 = scmp.le.s32.totalorder 2, %s20
      // Predicated region
      $region61: #{tpu_custom_call.1} parent=5 // pred_check
        %p723 = pneg %p722
      $region62: #{tpu_custom_call.1} parent=5 // pred_check_branch
        %725 = sbr.rel (%p723) target = $region64
      $region63: #{tpu_custom_call.1} parent=5 // pred_region
        %s726 = ssub.s32 %s20, 2
        // Predicated region
        $region65: #{tpu_custom_call.1} parent=63 // pred_check
          %p727 = pneg %p171
        $region66: #{tpu_custom_call.1} parent=63 // pred_check_branch
          %729 = sbr.rel (%p727) target = $region68
        $region67: #{tpu_custom_call.1} parent=63 // pred_region
          %s730 = sand.u32 %s156, 1
          %s731 = scalar_lea.sflag [#allocation4], %s730
          %s732 = sand.u32 %s156, 1
          %s733 = smul.addr %s732, 64
          %s734 = scalar_lea.vmem [#allocation9], %s733
          %736 = dma.done %s731, 1024
        $region68: #{tpu_custom_call.1} parent=63 // pred_fallthru
          _
        // Predicated region
        $region69: #{tpu_custom_call.1} parent=63 // pred_check
          %p737 = pneg %p199
        $region70: #{tpu_custom_call.1} parent=63 // pred_check_branch
          %739 = sbr.rel (%p737) target = $region72
        $region71: #{tpu_custom_call.1} parent=63 // pred_region
          %s740 = sand.u32 %s184, 1
          %s741 = scalar_lea.sflag [#allocation11], %s740
          %s742 = sand.u32 %s184, 1
          %s743 = smul.addr %s742, 64
          %s744 = scalar_lea.vmem [#allocation10], %s743
          %746 = dma.done %s741, 1024
        $region72: #{tpu_custom_call.1} parent=63 // pred_fallthru
          _
      $region64: #{tpu_custom_call.1} parent=5 // pred_fallthru
        _
    $region6: #{tpu_custom_call.1} parent=1 // loop_footer
      %s24 = sadd.s32 1, %s20
    $region7: #{tpu_custom_call.1} parent=1 // loop_footer_branch
      %19 = sbr.rel target = $region3
    $region8: #{tpu_custom_call.1} parent=1 // loop_exit
      _
    %747 = vsyncpa [#allocation3], 1
    %s748 = scalar_lea.sflag [#allocation3], 1
    %749 = vsyncpa %s748, 1
    %750 = vsyncpa [#allocation6], 1
    %751 = vsyncpa [#allocation4], 1
    %s752 = scalar_lea.sflag [#allocation4], 1
    %753 = vsyncpa %s752, 1
    %754 = vsyncpa [#allocation11], 1
    %s755 = scalar_lea.sflag [#allocation11], 1
    %756 = vsyncpa %s755, 1

</llo_original>
